<compile_context>
chip_gen: v5e
topology: v5e:2x2
jax: 0.10.0
libtpu: 0.0.40
codegen_flags: <defaults>
</compile_context>

<pallas_src>
import functools

import jax
import jax.numpy as jnp
from jax.experimental import pallas as pl
from jax.experimental.pallas import tpu as pltpu


def _round_up(v, m):
    return (v + m - 1) // m * m


def _dim_reschedule_kernel(x_ref, w_ref, p_ref, o_ref, *, n_logical, eps, compute_dtype):
    # Linear: y = x @ W_t + b.  W_t is (K, Np) bf16 (already transposed in the wrapper),
    # x is cast to bf16 in-kernel (no-op if the wrapper already cast it).
    x = x_ref[...].astype(compute_dtype)
    y = jnp.dot(x, w_ref[...], preferred_element_type=jnp.float32)   # (tm, Np) f32

    p = p_ref[...]                      # (8, Np) f32: rows 0/1/2 = bias / gamma / beta
    y = y + p[0:1, :]                   # padded lanes stay exactly 0 (zero W cols + bias)

    # LayerNorm over the logical feature dim.  Padded lanes of y are 0, so full-lane sums
    # equal the sums over the logical N; divide by n_logical.
    inv_n = jnp.float32(1.0 / n_logical)
    mean = jnp.sum(y, axis=-1, keepdims=True) * inv_n
    mean_sq = jnp.sum(y * y, axis=-1, keepdims=True) * inv_n
    var = jnp.maximum(mean_sq - mean * mean, 0.0)       # clamp: cancellation safety
    y_norm = (y - mean) * jax.lax.rsqrt(var + eps)

    # Affine + ReLU.  gamma/beta are zero in padded lanes -> padded output lanes are 0
    # and get sliced off in the wrapper.
    out = y_norm * p[1:2, :] + p[2:3, :]
    o_ref[...] = jnp.maximum(out, 0.0).astype(o_ref.dtype)


def _vmem_budget_bytes():
    """Generation-aware VMEM limit/budget (limit, budget_for_working_set)."""
    try:
        phys = int(pltpu.get_tpu_info().vmem_capacity_bytes)
    except Exception:
        phys = 64 * 1024 * 1024                       # conservative (v7x-sized) fallback
    if phys >= 100 * 1024 * 1024:                     # v5e / v6e: 128 MiB physical
        limit = 100 * 1024 * 1024
    else:                                             # v7x: 64 MiB physical
        limit = 48 * 1024 * 1024
    budget = limit - 12 * 1024 * 1024                 # headroom for Mosaic internal scratch
    return limit, budget


def dim_reschedule(x, weight, bias, gamma, beta, *,
                   tm=512, eps=1e-6,
                   compute_dtype=jnp.bfloat16, out_dtype=None):
    """Fused Linear -> LayerNorm(eps) -> ReLU.

    weight: (outchannel, inchannel); bias/gamma/beta: (outchannel,)  (PyTorch layout).
    """
    *lead, K = x.shape
    N = weight.shape[0]
    if out_dtype is None:
        out_dtype = x.dtype

    x2 = x.reshape(-1, K)
    M = x2.shape[0]

    # Lane-dense output: pad the feature dim up to a multiple of 128.
    Np = _round_up(N, 128)

    in_bytes = jnp.dtype(compute_dtype).itemsize
    out_bytes = jnp.dtype(out_dtype).itemsize
    vmem_limit, vmem_budget = _vmem_budget_bytes()

    def _vmem_estimate(t):
        return (2 * t * K * 4                # x tile, double-buffered (f32 worst case)
                + 2 * K * Np * in_bytes      # resident W (double-buffered; see TODO Buffered(1))
                + 2 * 8 * Np * 4             # stacked bias/gamma/beta
                + 2 * t * Np * out_bytes     # out tile, double-buffered
                + t * K * in_bytes           # in-kernel bf16 copy of x
                + 3 * t * Np * 4)            # f32 intermediates: y, y*y, y_norm

    # Large-layer guard: the resident-W scheme stops scaling when even the smallest row
    # tile overflows VMEM.
    if _vmem_estimate(16) > vmem_budget:
        # TODO(synk): add a K-tiled grid axis with an f32 VMEM accumulator and a two-pass
        # LayerNorm over N tiles (and consider fp8 weights on v7x) for very large layers.
        raise ValueError(
            f"DimReschedule layer too large for resident-W kernel: K={K}, N={N} "
            f"(padded {Np}) needs > {vmem_budget} bytes of VMEM even at tm=16.")

    # Row tile: as large as useful, multiple of 16 (bf16 sublane packing), shrunk to fit
    # the VMEM budget, then capped so the parallel grid axis has >=2 (>=4) steps.
    tm_eff = min(tm, _round_up(max(M, 1), 16))
    tm_eff = max(16, (tm_eff // 16) * 16)
    while tm_eff > 16 and _vmem_estimate(tm_eff) > vmem_budget:
        tm_eff = max(16, (tm_eff // 2 // 16) * 16)

    if M >= 64:
        target_tiles = 4
    elif M > 16:
        target_tiles = 2
    else:
        target_tiles = 1
    if target_tiles > 1:
        tm_eff = min(tm_eff, max(16, _round_up((M + target_tiles - 1) // target_tiles, 16)))

    M_pad = _round_up(M, tm_eff)

    # x: pad+cast only when row padding is unavoidable; otherwise pass as-is and cast
    # to bf16 inside the kernel (halves x HBM traffic for the memory-bound case).
    if M_pad != M:
        x_p = jnp.pad(x2, ((0, M_pad - M), (0, 0))).astype(compute_dtype)
    else:
        x_p = x2

    # W: pad feature dim (zero rows), transpose once to (K, Np), cast to bf16.
    w_p = jnp.pad(weight, ((0, Np - N), (0, 0))).T.astype(compute_dtype)       # (K, Np)

    # bias / gamma / beta stacked into one (8, Np) f32 operand; padded lanes are zero.
    params = jnp.zeros((8, Np), dtype=jnp.float32)
    params = params.at[0, :N].set(bias.astype(jnp.float32))
    params = params.at[1, :N].set(gamma.astype(jnp.float32))
    params = params.at[2, :N].set(beta.astype(jnp.float32))

    kernel = functools.partial(_dim_reschedule_kernel, n_logical=N, eps=float(eps),
                               compute_dtype=compute_dtype)

    out = pl.pallas_call(
        kernel,
        out_shape=jax.ShapeDtypeStruct((M_pad, Np), out_dtype),
        grid_spec=pltpu.PrefetchScalarGridSpec(
            num_scalar_prefetch=0,
            grid=(M_pad // tm_eff,),
            in_specs=[
                pl.BlockSpec((tm_eff, K), lambda i: (i, 0)),   # x row tile
                pl.BlockSpec((K, Np), lambda i: (0, 0)),       # W (K, Np), resident
                pl.BlockSpec((8, Np), lambda i: (0, 0)),       # stacked bias/gamma/beta
            ],
            out_specs=pl.BlockSpec((tm_eff, Np), lambda i: (i, 0)),
        ),
        compiler_params=pltpu.CompilerParams(
            dimension_semantics=("parallel",),     # shards row tiles across TCs on v7x
            vmem_limit_bytes=vmem_limit),
    )(x_p, w_p, params)

    return out[:M, :N].reshape(*lead, N)


def _reference(x, weight, bias, gamma, beta, eps=1e-6):
    y = jnp.einsum("...k,nk->...n", x, weight) + bias
    mean = jnp.mean(y, axis=-1, keepdims=True)
    var = jnp.mean((y - mean) ** 2, axis=-1, keepdims=True)
    y = (y - mean) / jnp.sqrt(var + eps)
    y = y * gamma + beta
    return jnp.maximum(y, 0.0)


if __name__ == "__main__":
    key = jax.random.PRNGKey(0)
    inchannel, outchannel = 32, 64
    batch, seq = 2, 8

    k_x, k_w, k_b = jax.random.split(key, 3)
    x = jax.random.normal(k_x, (batch, seq, inchannel), dtype=jnp.float32)

    # Deterministic synthetic parameters (shapes per nn.Linear / LayerNorm init).
    bound = 1.0 / jnp.sqrt(inchannel)
    weight = jax.random.uniform(k_w, (outchannel, inchannel),
                                minval=-bound, maxval=bound, dtype=jnp.float32)
    bias = jax.random.uniform(k_b, (outchannel,),
                              minval=-bound, maxval=bound, dtype=jnp.float32)
    gamma = jnp.ones((outchannel,), dtype=jnp.float32)   # LayerNorm weight
    beta = jnp.zeros((outchannel,), dtype=jnp.float32)   # LayerNorm bias

    out = dim_reschedule(x, weight, bias, gamma, beta)
    out = jax.block_until_ready(out)
    assert out.shape == (batch, seq, outchannel)
    assert out.dtype == jnp.float32

    # Reference computed from bf16-rounded operands (the kernel feeds bf16 to the MXU
    # with f32 accumulation), isolating kernel correctness from the intended input
    # quantization.
    x_q = x.astype(jnp.bfloat16).astype(jnp.float32)
    w_q = weight.astype(jnp.bfloat16).astype(jnp.float32)
    ref = _reference(x_q, w_q, bias, gamma, beta, eps=1e-6)
    assert jnp.allclose(out, ref, atol=2e-3, rtol=2e-3), float(jnp.max(jnp.abs(out - ref)))

    print("KERNEL_OK")
</pallas_src>

<mosaic_0001>
module attributes {stable_mosaic.version = 11 : i64} {
  func.func @_dim_reschedule_kernel(%arg0: i32, %arg1: memref<16x32xf32, #tpu.memory_space<vmem>>, %arg2: memref<32x128xbf16, #tpu.memory_space<vmem>>, %arg3: memref<8x128xf32, #tpu.memory_space<vmem>>, %arg4: memref<16x128xf32, #tpu.memory_space<vmem>>) attributes {dimension_semantics = [#tpu.dimension_semantics<parallel>], iteration_bounds = array<i64: 1>, scalar_prefetch = 0 : i64, scratch_operands = 0 : i64, tpu.core_type = #tpu.core_type<tc>, window_params = [{transform_indices = @transform_0, window_bounds = array<i64: 16, 32>}, {pipeline_mode = #tpu.pipeline_mode<synchronous>, transform_indices = @transform_1, window_bounds = array<i64: 32, 128>}, {pipeline_mode = #tpu.pipeline_mode<synchronous>, transform_indices = @transform_2, window_bounds = array<i64: 8, 128>}, {transform_indices = @transform_3, window_bounds = array<i64: 16, 128>}]} {
    %c0 = arith.constant 0 : index
    %c0_0 = arith.constant 0 : index
    %0 = vector.load %arg1[%c0, %c0_0] : memref<16x32xf32, #tpu.memory_space<vmem>>, vector<16x32xf32>
    %1 = arith.truncf %0 : vector<16x32xf32> to vector<16x32xbf16>
    %c0_1 = arith.constant 0 : index
    %c0_2 = arith.constant 0 : index
    %2 = vector.load %arg2[%c0_1, %c0_2] : memref<32x128xbf16, #tpu.memory_space<vmem>>, vector<32x128xbf16>
    %cst = arith.constant dense<0.000000e+00> : vector<16x128xf32>
    %3 = tpu.matmul %1, %2, %cst {dimension_numbers = #tpu.dot_dimension_numbers<[1], [0], [0], [1], [0, 0, 1, 1], [], []>} : vector<16x32xbf16>, vector<32x128xbf16>, vector<16x128xf32> -> vector<16x128xf32>
    %c0_3 = arith.constant 0 : index
    %c0_4 = arith.constant 0 : index
    %4 = vector.load %arg3[%c0_3, %c0_4] : memref<8x128xf32, #tpu.memory_space<vmem>>, vector<8x128xf32>
    %5 = vector.extract_strided_slice %4 {offsets = [0, 0], sizes = [1, 128], strides = [1, 1]} : vector<8x128xf32> to vector<1x128xf32>
    %6 = vector.broadcast %5 : vector<1x128xf32> to vector<16x128xf32>
    %7 = arith.addf %3, %6 : vector<16x128xf32>
    %cst_5 = arith.constant dense<0.000000e+00> : vector<16xf32>
    %8 = vector.multi_reduction <add>, %7, %cst_5 [1] : vector<16x128xf32> to vector<16xf32>
    %9 = vector.shape_cast %8 : vector<16xf32> to vector<16x1xf32>
    %cst_6 = arith.constant 1.562500e-02 : f32
    %10 = vector.broadcast %cst_6 : f32 to vector<16x1xf32>
    %11 = arith.mulf %9, %10 : vector<16x1xf32>
    %12 = arith.mulf %7, %7 : vector<16x128xf32>
    %cst_7 = arith.constant dense<0.000000e+00> : vector<16xf32>
    %13 = vector.multi_reduction <add>, %12, %cst_7 [1] : vector<16x128xf32> to vector<16xf32>
    %14 = vector.shape_cast %13 : vector<16xf32> to vector<16x1xf32>
    %cst_8 = arith.constant 1.562500e-02 : f32
    %15 = vector.broadcast %cst_8 : f32 to vector<16x1xf32>
    %16 = arith.mulf %14, %15 : vector<16x1xf32>
    %17 = arith.mulf %11, %11 : vector<16x1xf32>
    %18 = arith.subf %16, %17 : vector<16x1xf32>
    %cst_9 = arith.constant 0.000000e+00 : f32
    %19 = vector.broadcast %cst_9 : f32 to vector<16x1xf32>
    %20 = arith.maximumf %18, %19 : vector<16x1xf32>
    %21 = vector.broadcast %11 : vector<16x1xf32> to vector<16x128xf32>
    %22 = arith.subf %7, %21 : vector<16x128xf32>
    %cst_10 = arith.constant 9.99999997E-7 : f32
    %23 = vector.broadcast %cst_10 : f32 to vector<16x1xf32>
    %24 = arith.addf %20, %23 : vector<16x1xf32>
    %25 = math.rsqrt %24 : vector<16x1xf32>
    %26 = vector.broadcast %25 : vector<16x1xf32> to vector<16x128xf32>
    %27 = arith.mulf %22, %26 : vector<16x128xf32>
    %28 = vector.extract_strided_slice %4 {offsets = [1, 0], sizes = [1, 128], strides = [1, 1]} : vector<8x128xf32> to vector<1x128xf32>
    %29 = vector.broadcast %28 : vector<1x128xf32> to vector<16x128xf32>
    %30 = arith.mulf %27, %29 : vector<16x128xf32>
    %31 = vector.extract_strided_slice %4 {offsets = [2, 0], sizes = [1, 128], strides = [1, 1]} : vector<8x128xf32> to vector<1x128xf32>
    %32 = vector.broadcast %31 : vector<1x128xf32> to vector<16x128xf32>
    %33 = arith.addf %30, %32 : vector<16x128xf32>
    %cst_11 = arith.constant 0.000000e+00 : f32
    %34 = vector.broadcast %cst_11 : f32 to vector<16x128xf32>
    %35 = arith.maximumf %33, %34 : vector<16x128xf32>
    %c0_12 = arith.constant 0 : index
    %c0_13 = arith.constant 0 : index
    %36 = vector.load %arg4[%c0_12, %c0_13] : memref<16x128xf32, #tpu.memory_space<vmem>>, vector<16x128xf32>
    tpu.vector_store %arg4[%c0_12, %c0_13], %35 {strides = array<i32>} : memref<16x128xf32, #tpu.memory_space<vmem>>, vector<16x128xf32>,
    return
  }
  func.func @transform_0(%arg0: i32) -> (i32, i32) {
    %c0_i32 = arith.constant 0 : i32
    %c0_i32_0 = arith.constant 0 : i32
    return %arg0, %c0_i32 : i32, i32
  }
  func.func @transform_1(%arg0: i32) -> (i32, i32) {
    %c0_i32 = arith.constant 0 : i32
    %c0_i32_0 = arith.constant 0 : i32
    %c0_i32_1 = arith.constant 0 : i32
    return %c0_i32, %c0_i32_0 : i32, i32
  }
  func.func @transform_2(%arg0: i32) -> (i32, i32) {
    %c0_i32 = arith.constant 0 : i32
    %c0_i32_0 = arith.constant 0 : i32
    %c0_i32_1 = arith.constant 0 : i32
    return %c0_i32, %c0_i32_0 : i32, i32
  }
  func.func @transform_3(%arg0: i32) -> (i32, i32) {
    %c0_i32 = arith.constant 0 : i32
    %c0_i32_0 = arith.constant 0 : i32
    return %arg0, %c0_i32 : i32, i32
  }
}

</mosaic_0001>

<llo_original>
// kernel: tpu_custom_call.1
$region0: #{tpu_custom_call.1}
  #allocation0 [shape = 'u32[]', space=smem, size = 0x4, offset = 0x4, fixed_abs, tag = 'smem constant byte address 0x4 - core index']
  #allocation1 [shape = 'u32[72,128]{1,0:T(1,128)}', space=vmem, size = 0x9000, scoped, tag = 'internal scratch']
  %s0 = inlined_call_operand.hbm [shape: f32[16,32], index: 0, kind: input, shape index: {}]
  %s1 = inlined_call_operand.hbm [shape: bf16[32,128], index: 1, kind: input, shape index: {}]
  %s2 = inlined_call_operand.hbm [shape: f32[8,128], index: 2, kind: input, shape index: {}]
  %s3 = inlined_call_operand.hbm [shape: f32[16,128], index: 3, kind: output, shape index: {}]
  %s4 = sld [smem:[#allocation0]]
  $region34: #{tpu_custom_call.1} parent=0
    _
  %s6 = ssub.s32 1, %s4
  %s7 = scalar_select 0, %s6, %s4
  $region1: #{tpu_custom_call.1} parent=0
    #allocation2 [shape = 'u8[8192]{0}', space=vmem, size = 0x2000, scoped, tag = 'input window, operand 0, single buffered']
    #allocation3 [shape = 's32[1]{0}', space=sflag, size = 0x4, scoped, tag = 'scoped memory for tpu_custom_call.1']
    #allocation4 [shape = 's32[1]{0}', space=sflag, size = 0x4, scoped, tag = 'scoped memory for tpu_custom_call.1']
    #allocation5 [shape = 'u8[8192]{0}', space=vmem, size = 0x2000, scoped, tag = 'input window, operand 1, single buffered']
    #allocation6 [shape = 's32[1]{0}', space=sflag, size = 0x4, scoped, tag = 'scoped memory for tpu_custom_call.1']
    #allocation7 [shape = 'u8[4096]{0}', space=vmem, size = 0x1000, scoped, tag = 'input window, operand 2, single buffered']
    #allocation8 [shape = 'u8[8192]{0}', space=vmem, size = 0x2000, scoped, tag = 'output window, operand 0, single buffered']
    %8 = vsyncpa [#allocation3], 0
    %9 = vsyncpa [#allocation6], 0
    %10 = vsyncpa [#allocation4], 0
    // Predicated region
    $region2: #{tpu_custom_call.1} parent=1 // pred_check
      _
    $region3: #{tpu_custom_call.1} parent=1 // pred_check_branch
      %12 = sbr.rel (0) target = $region5
    $region4: #{tpu_custom_call.1} parent=1 // pred_region
      %14 = vsyncadd [#allocation3], 0
      %s15 = sshll.u32 %s0, 4
      %s16 = int_to_ptr.hbm [resolvable:$true] %s15
      %s17 = sshll.u32 [#allocation2], 4
      %s18 = int_to_ptr.vmem [resolvable:$true] %s17
      %23 = dma.hbm_to_vmem [thread:$0]  %s16, 256, %s18, [#allocation3], 128, 128, 8
    $region5: #{tpu_custom_call.1} parent=1 // pred_fallthru
      _
    // Predicated region
    $region6: #{tpu_custom_call.1} parent=1 // pred_check
      _
    $region7: #{tpu_custom_call.1} parent=1 // pred_check_branch
      %25 = sbr.rel (0) target = $region9
    $region8: #{tpu_custom_call.1} parent=1 // pred_region
      %27 = vsyncadd [#allocation6], 0
      %s28 = sshll.u32 %s1, 4
      %s29 = int_to_ptr.hbm [resolvable:$true] %s28
      %s30 = sshll.u32 [#allocation5], 4
      %s31 = int_to_ptr.vmem [resolvable:$true] %s30
      %36 = dma.hbm_to_vmem [thread:$0]  %s29, 256, %s31, [#allocation6], 64, 64, 4
    $region9: #{tpu_custom_call.1} parent=1 // pred_fallthru
      _
    // Predicated region
    $region10: #{tpu_custom_call.1} parent=1 // pred_check
      _
    $region11: #{tpu_custom_call.1} parent=1 // pred_check_branch
      %38 = sbr.rel (0) target = $region13
    $region12: #{tpu_custom_call.1} parent=1 // pred_region
      %40 = vsyncadd [#allocation6], 0
      %s42 = sshll.u32 %s2, 4
      %s43 = int_to_ptr.hbm [resolvable:$true] %s42
      %s44 = sshll.u32 [#allocation7], 4
      %s45 = int_to_ptr.vmem [resolvable:$true] %s44
      %47 = dma.hbm_to_vmem [thread:$0]  %s43, 128, %s45, [#allocation6]
    $region13: #{tpu_custom_call.1} parent=1 // pred_fallthru
      _
    // Predicated region
    $region14: #{tpu_custom_call.1} parent=1 // pred_check
      _
    $region15: #{tpu_custom_call.1} parent=1 // pred_check_branch
      %49 = sbr.rel (0) target = $region17
    $region16: #{tpu_custom_call.1} parent=1 // pred_region
      %51 = dma.done [#allocation3], 256
    $region17: #{tpu_custom_call.1} parent=1 // pred_fallthru
      _
    // Predicated region
    $region18: #{tpu_custom_call.1} parent=1 // pred_check
      _
    $region19: #{tpu_custom_call.1} parent=1 // pred_check_branch
      %53 = sbr.rel (0) target = $region21
    $region20: #{tpu_custom_call.1} parent=1 // pred_region
      %55 = dma.done [#allocation6], 256
    $region21: #{tpu_custom_call.1} parent=1 // pred_fallthru
      _
    // Predicated region
    $region22: #{tpu_custom_call.1} parent=1 // pred_check
      _
    $region23: #{tpu_custom_call.1} parent=1 // pred_check_branch
      %57 = sbr.rel (0) target = $region25
    $region24: #{tpu_custom_call.1} parent=1 // pred_region
      %59 = dma.done [#allocation6], 128
    $region25: #{tpu_custom_call.1} parent=1 // pred_fallthru
      _
    %v61 = vld [vmem:[#allocation2] sm:$0xff]
    %v62 = vld [vmem:[#allocation2 + $0x8] sm:$0xff]
    %v63 = vpack.c.bf16 %v62, %v61
    %v64 = vld [vmem:[#allocation5] sm:$0xf]
    %v65 = vld [vmem:[#allocation5 + $0x4] sm:$0xf]
    %v66 = vld [vmem:[#allocation5 + $0x8] sm:$0xf]
    %v67 = vld [vmem:[#allocation5 + $0xc] sm:$0xf]
    %v68 = vld [vmem:[#allocation7] sm:$0xff]
    %v69 = vperm.slane %v68, 0
    %v74 = vunpack.c.l.b16 %v64
    %v75 = vunpack.c.l.b16 %v65
    %v76 = vunpack.c.l.b16 %v66
    %v77 = vunpack.c.l.b16 %v67
    %v78 = vpack.c.b16 %v75, %v74
    %v79 = vpack.c.b16 %v77, %v76
    %vm82 = vcmask 261120
    %v84 = vsel %vm82, %v63, 0
    %86 = vmatpush.bf16.msra.mxu0 0
    %87 = vmatpush.bf16.msra.mxu0 0
    %88 = vmatpush.bf16.msra.mxu0 0
    %89 = vmatpush.bf16.msra.mxu0 0
    %90 = vmatpush.bf16.msra.mxu0 0
    %91 = vmatpush.bf16.msra.mxu0 0
    %92 = vmatpush.bf16.msra.mxu0 %v79
    %93 = vmatpush.bf16.msra.mxu0 %v78
    %94 = vmatmul.bf16.gmra.mxu0 %v84
    %v95 = vpop.f32.mrf.mxu0
    %v96 = vadd.f32 %v69, %v95
    %v97 = vpop.f32.mrf.mxu0
    %v98 = vadd.f32 %v69, %v97
    %99 = vdwg.mxu0
    %100 = vadd.xlane.f32.xlu0 %v96
    %v101 = vpop.xlane.xlu0 %100
    %102 = vadd.xlane.f32.xlu0 %v98
    %v103 = vpop.xlane.xlu0 %102
    %v104 = vmul.f32 %v101, 0.015625
    %v105 = vmul.f32 %v103, 0.015625
    %v106 = vmul.f32 %v96, %v96
    %v107 = vmul.f32 %v98, %v98
    %108 = vadd.xlane.f32.xlu0 %v106
    %v109 = vpop.xlane.xlu0 %108
    %110 = vadd.xlane.f32.xlu0 %v107
    %v111 = vpop.xlane.xlu0 %110
    %v112 = vmul.f32 %v109, 0.015625
    %v113 = vmul.f32 %v111, 0.015625
    %v114 = vmul.f32 %v104, %v104
    %v115 = vmul.f32 %v105, %v105
    %v116 = vsub.f32 %v112, %v114
    %v117 = vsub.f32 %v113, %v115
    %v118 = vmax.f32 %v116, 0.0
    %v119 = vmax.f32 %v117, 0.0
    %v120 = vsub.f32 %v96, %v104
    %v121 = vsub.f32 %v98, %v105
    %v122 = vadd.f32 %v118, 1e-06
    %v123 = vadd.f32 %v119, 1e-06
    %v124 = vrsqrt.pop %v122
    %v125 = vmul.f32 %v124, %v122
    %v126 = vmul.f32 %v125, %v124
    %v127 = vmul.f32 0.5, %v126
    %v128 = vsub.f32 1.5, %v127
    %v129 = vmul.f32 %v124, %v128
    %vm130 = vweird.f32 %v122
    %vm131 = vweird.f32 %v124
    %vm132 = vmor %vm130, %vm131
    %v133 = vsel %vm132, %v124, %v129
    %v134 = vrsqrt.pop %v123
    %v135 = vmul.f32 %v134, %v123
    %v136 = vmul.f32 %v135, %v134
    %v137 = vmul.f32 0.5, %v136
    %v138 = vsub.f32 1.5, %v137
    %v139 = vmul.f32 %v134, %v138
    %vm140 = vweird.f32 %v123
    %vm141 = vweird.f32 %v134
    %vm142 = vmor %vm140, %vm141
    %v143 = vsel %vm142, %v134, %v139
    %v144 = vmul.f32 %v120, %v133
    %v145 = vmul.f32 %v121, %v143
    %v146 = vperm.slane %v68, 1
    %v147 = vmul.f32 %v144, %v146
    %v148 = vmul.f32 %v145, %v146
    %v149 = vperm.slane %v68, 2
    %v150 = vadd.f32 %v147, %v149
    %v151 = vadd.f32 %v148, %v149
    %v152 = vmax.f32 %v150, 0.0
    %v153 = vmax.f32 %v151, 0.0
    %154 = vst [vmem:[#allocation8] sm:$0xff] %v152
    %155 = vst [vmem:[#allocation8 + $0x8] sm:$0xff] %v153
    // Predicated region
    $region26: #{tpu_custom_call.1} parent=1 // pred_check
      _
    $region27: #{tpu_custom_call.1} parent=1 // pred_check_branch
      %157 = sbr.rel (0) target = $region29
    $region28: #{tpu_custom_call.1} parent=1 // pred_region
      %159 = vsyncadd [#allocation4], 0
      %s160 = sshll.u32 [#allocation8], 4
      %s161 = int_to_ptr.vmem [resolvable:$true] %s160
      %s162 = sshll.u32 %s3, 4
      %s163 = int_to_ptr.hbm [resolvable:$true] %s162
      %168 = dma.vmem_to_hbm [thread:$0]  %s161, 256, %s163, [#allocation4], 128, 128, 8
    $region29: #{tpu_custom_call.1} parent=1 // pred_fallthru
      _
    // Predicated region
    $region30: #{tpu_custom_call.1} parent=1 // pred_check
      _
    $region31: #{tpu_custom_call.1} parent=1 // pred_check_branch
      %170 = sbr.rel (0) target = $region33
    $region32: #{tpu_custom_call.1} parent=1 // pred_region
      %172 = dma.done [#allocation4], 256
    $region33: #{tpu_custom_call.1} parent=1 // pred_fallthru
      _
    %173 = vsyncpa [#allocation3], 1
    %174 = vsyncpa [#allocation6], 1
    %175 = vsyncpa [#allocation4], 1

</llo_original>
